<compile_context>
chip_gen: v7x
topology: tpu7x:2x2x1
jax: 0.10.0
libtpu: 0.0.40
codegen_flags: <defaults>
</compile_context>

<pallas_src>
import math
import functools

import numpy as np
import jax
import jax.numpy as jnp
from jax.experimental import pallas as pl
from jax.experimental.pallas import tpu as pltpu


# =============================================================================
# Embedding + positional-encoding kernel (gather via scalar-prefetch index_map)
# =============================================================================

def _embed_pe_kernel(ids_ref, row_ref, pe_ref, out_ref, *, scale):
    del ids_ref  # only consumed inside the index_maps
    out_ref[...] = row_ref[...] * scale + pe_ref[...]


def embed_positional(ids, table, pe):
    """x = embedding(ids) * sqrt(E) + pe  (matches torch Embedding+PositionalEmbedding)."""
    B, S = ids.shape
    V, E = table.shape
    scale = math.sqrt(E)
    # Reshape so each gathered row is a full (1, E) trailing block (last two block
    # dims equal the full array dims -> no (8,128) divisibility concerns).
    table3 = table.reshape(V, 1, E)
    pe3 = pe.reshape(S, 1, E)

    out = pl.pallas_call(
        functools.partial(_embed_pe_kernel, scale=scale),
        out_shape=jax.ShapeDtypeStruct((B * S, 1, E), jnp.float32),
        grid_spec=pltpu.PrefetchScalarGridSpec(
            num_scalar_prefetch=1,           # token ids -> SMEM, visible to index_maps
            grid=(B, S),
            in_specs=[
                pl.BlockSpec((1, 1, E), lambda b, s, ids: (ids[b, s], 0, 0)),  # table row gather
                pl.BlockSpec((1, 1, E), lambda b, s, ids: (s, 0, 0)),          # positional row
            ],
            out_specs=pl.BlockSpec((1, 1, E), lambda b, s, ids: (b * S + s, 0, 0)),
        ),
        compiler_params=pltpu.CompilerParams(
            dimension_semantics=("arbitrary", "arbitrary")),
    )(ids.astype(jnp.int32), table3, pe3)
    return out.reshape(B, S, E)


# =============================================================================
# TransformerBlock kernel
# =============================================================================

def _transformer_block_kernel(
        xq_ref, x_ref,
        wq_ref, bq_ref, wk_ref, bk_ref, wv_ref, bv_ref,
        wo_ref, bo_ref, g1_ref, be1_ref,
        w1_ref, b1_ref, w2_ref, b2_ref, g2_ref, be2_ref,
        out_ref,
        scores_ref, cat_ref,
        *, h, d_k):
    cdt = wq_ref.dtype                 # MXU operand dtype (f32 or bf16)
    xq = xq_ref[0]                     # (TQ, E)  query rows + residual ("value") rows
    xs = x_ref[0]                      # (S,  E)  key / value source rows

    def mm(a, w):
        # MXU matmul: operands in `cdt`, accumulation always f32.
        return jnp.dot(a.astype(cdt), w.astype(cdt),
                       preferred_element_type=jnp.float32)

    wq, wk, wv = wq_ref[...], wk_ref[...], wv_ref[...]
    bq, bk, bv = bq_ref[...], bk_ref[...], bv_ref[...]
    inv_sqrt_dk = 1.0 / math.sqrt(d_k)

    # Per-head projections with the SHARED (d_k, d_k) weights (no kron block-diag),
    # scores stacked directly into one (h, TQ, S) VMEM buffer.
    v_heads = []
    for i in range(h):
        sl = slice(i * d_k, (i + 1) * d_k)
        qh = mm(xq[:, sl], wq) + bq                 # (TQ, d_k)
        kh = mm(xs[:, sl], wk) + bk                 # (S,  d_k)
        v_heads.append(mm(xs[:, sl], wv) + bv)      # (S,  d_k)
        scores_ref[i] = mm(qh, kh.T) * inv_sqrt_dk  # (TQ, S)

    # Softmax over the HEAD axis (torch softmax(dim=1) quirk): elementwise per (q,k),
    # done as single stacked reductions; reciprocal goes to the EUP.
    scores = scores_ref[...]                                   # (h, TQ, S) f32
    m = jnp.max(scores, axis=0, keepdims=True)
    e = jnp.exp(scores - m)
    p = e * pl.reciprocal(jnp.sum(e, axis=0, keepdims=True), approx=True)

    # Weighted values written head-slice-wise into VMEM scratch (no lane concat).
    for i in range(h):
        cat_ref[:, i * d_k:(i + 1) * d_k] = mm(p[i], v_heads[i])

    attn = mm(cat_ref[...], wo_ref[...]) + bo_ref[...]          # (TQ, E)

    def layer_norm(v, g, b):
        mu = jnp.mean(v, axis=-1, keepdims=True)
        var = jnp.mean((v - mu) ** 2, axis=-1, keepdims=True)
        return (v - mu) * jax.lax.rsqrt(var + 1e-5) * g + b

    out1 = layer_norm(attn + xq, g1_ref[...], be1_ref[...])

    # Feed-forward: Linear -> ReLU -> Linear (f32 elementwise, `cdt` matmul operands).
    # TODO(synk): for very large E*expansion (v7x 64 MiB VMEM) tile the FFN hidden dim
    # with a reduction grid axis + f32 accumulator instead of holding W1/W2 whole.
    hid = jnp.maximum(mm(out1, w1_ref[...]) + b1_ref[...], 0.0)
    ff = mm(hid, w2_ref[...]) + b2_ref[...]

    out_ref[0] = layer_norm(ff + out1, g2_ref[...], be2_ref[...])


def _pick_q_tile(S):
    # Big, 8/128-aligned query tiles feed the 256-wide MXU (v6e/v7x) and bound VMEM;
    # tiny demo sequences just use the whole S.
    for t in (512, 256, 128):
        if S % t == 0:
            return t
    return S


def transformer_block(x, params, *, h, d_k, q_tile=None):
    B, S, E = x.shape
    tq = q_tile if q_tile is not None else _pick_q_tile(S)
    assert S % tq == 0
    n_q = S // tq
    hidden = params[10].shape[1]      # w1 is (E, hidden)

    kernel = functools.partial(_transformer_block_kernel, h=h, d_k=d_k)

    xq_spec = pl.BlockSpec((1, tq, E), lambda b, qi: (b, qi, 0))   # query / residual tile
    xf_spec = pl.BlockSpec((1, S, E), lambda b, qi: (b, 0, 0))     # full K/V rows
    w_specs = [pl.BlockSpec(p.shape, lambda b, qi: (0, 0)) for p in params]

    weight_bytes = sum(int(p.size) * p.dtype.itemsize for p in params)
    flops = 2 * B * S * (3 * E * d_k + 2 * S * E + E * E + 2 * E * hidden)
    cost = pl.CostEstimate(flops=int(flops),
                           transcendentals=int(B * h * S * S),
                           bytes_accessed=int(4 * 3 * B * S * E + weight_bytes))

    return pl.pallas_call(
        kernel,
        out_shape=jax.ShapeDtypeStruct((B, S, E), jnp.float32),
        grid=(B, n_q),
        in_specs=[xq_spec, xf_spec] + w_specs,
        out_specs=pl.BlockSpec((1, tq, E), lambda b, qi: (b, qi, 0)),
        scratch_shapes=[pltpu.VMEM((h, tq, S), jnp.float32),   # stacked head scores
                        pltpu.VMEM((tq, E), jnp.float32)],     # concatenated head contexts
        compiler_params=pltpu.CompilerParams(
            dimension_semantics=("parallel", "parallel"),
            vmem_limit_bytes=48 * 1024 * 1024),
        cost_estimate=cost,
    )(x, x, *params)


def encoder_forward(ids, table, pe, kernel_layers, *, h, d_k, q_tile=None):
    x = embed_positional(ids, table, pe)
    for lp in kernel_layers:
        x = transformer_block(x, lp, h=h, d_k=d_k, q_tile=q_tile)
    return x


# =============================================================================
# Parameters (torch-equivalent init) and kernel-side layout
# =============================================================================

def make_positional_encoding(d_seq, d_embedding):
    pe = np.zeros((d_seq, d_embedding), dtype=np.float32)
    for pos in range(d_seq):
        for i in range(0, d_embedding, 2):
            pe[pos, i] = math.sin(pos / 10000 ** (2 * i / d_embedding))
            pe[pos, i + 1] = math.cos(pos / 10000 ** (2 * (i + 1) / d_embedding))
    return jnp.asarray(pe)


def init_linear(rng, fan_in, fan_out):
    k1, k2 = jax.random.split(rng)
    bound = 1.0 / math.sqrt(fan_in)
    W = jax.random.uniform(k1, (fan_out, fan_in), jnp.float32, -bound, bound)  # torch (out,in)
    b = jax.random.uniform(k2, (fan_out,), jnp.float32, -bound, bound)
    return W, b


def make_layer_params(rng, E, h, expansion_factor):
    d_k = E // h
    ks = jax.random.split(rng, 6)
    Wq, bq = init_linear(ks[0], d_k, d_k)
    Wk, bk = init_linear(ks[1], d_k, d_k)
    Wv, bv = init_linear(ks[2], d_k, d_k)
    Wo, bo = init_linear(ks[3], E, E)
    W1, b1 = init_linear(ks[4], E, E * expansion_factor)
    W2, b2 = init_linear(ks[5], E * expansion_factor, E)
    return (Wq, bq, Wk, bk, Wv, bv, Wo, bo, W1, b1, W2, b2)


def to_kernel_params(p, compute_dtype):
    """Pre-transposed (in,out) weights in the MXU operand dtype; biases / LN affine stay f32."""
    (Wq, bq, Wk, bk, Wv, bv, Wo, bo, W1, b1, W2, b2) = p
    E = Wo.shape[0]
    w = lambda W: jnp.asarray(W.T, compute_dtype)
    r = lambda b: jnp.asarray(b, jnp.float32)[None, :]
    ones = jnp.ones((1, E), jnp.float32)
    zeros = jnp.zeros((1, E), jnp.float32)
    return (w(Wq), r(bq), w(Wk), r(bk), w(Wv), r(bv), w(Wo), r(bo),
            ones, zeros, w(W1), r(b1), w(W2), r(b2), ones, zeros)


# =============================================================================
# Pure-JAX reference (faithful to the PyTorch module, incl. its quirks).
# `compute_dtype` mirrors the kernel's matmul-operand cast so the bf16 path can
# be validated tightly; with f32 it is exactly the PyTorch-semantics reference.
# =============================================================================

def _ln(x, eps=1e-5):
    mu = jnp.mean(x, axis=-1, keepdims=True)
    var = jnp.mean((x - mu) ** 2, axis=-1, keepdims=True)
    return (x - mu) / jnp.sqrt(var + eps)


def reference_block(x, p, *, h, d_k, compute_dtype):
    (Wq, bq, Wk, bk, Wv, bv, Wo, bo, W1, b1, W2, b2) = p
    B, S, E = x.shape
    c = lambda a: a.astype(compute_dtype)
    f32 = jnp.float32

    def proj(inp, W, b):
        xh = inp.reshape(B, S, h, d_k)
        return jnp.einsum('bshd,od->bsho', c(xh), c(W), preferred_element_type=f32) + b

    k = jnp.transpose(proj(x, Wk, bk), (0, 2, 1, 3))   # (B,h,S,d_k)
    q = jnp.transpose(proj(x, Wq, bq), (0, 2, 1, 3))
    v = jnp.transpose(proj(x, Wv, bv), (0, 2, 1, 3))

    prod = jnp.einsum('bhqd,bhkd->bhqk', c(q), c(k), preferred_element_type=f32) / math.sqrt(d_k)
    prod = jax.nn.softmax(prod, axis=1)                # HEAD-axis softmax (torch dim=1); mask is a no-op
    score = jnp.einsum('bhqk,bhkd->bhqd', c(prod), c(v), preferred_element_type=f32)
    concat = jnp.transpose(score, (0, 2, 1, 3)).reshape(B, S, E)
    attn = jnp.einsum('bse,oe->bso', c(concat), c(Wo), preferred_element_type=f32) + bo

    out1 = _ln(attn + x)
    hid = jnp.maximum(jnp.einsum('bse,fe->bsf', c(out1), c(W1), preferred_element_type=f32) + b1, 0.0)
    ff = jnp.einsum('bsf,ef->bse', c(hid), c(W2), preferred_element_type=f32) + b2
    return _ln(ff + out1)


def reference_encoder(ids, table, pe, torch_layers, *, h, d_k, compute_dtype):
    E = table.shape[1]
    x = table[ids] * math.sqrt(E) + pe[None, :, :]
    for p in torch_layers:
        x = reference_block(x, p, h=h, d_k=d_k, compute_dtype=compute_dtype)
    return x


# =============================================================================
# main
# =============================================================================

if __name__ == "__main__":
    d_vocab, d_seq, d_embedding = 64, 8, 32
    h, expansion_factor, num_layers, batch = 4, 2, 2, 2
    d_k = d_embedding // h

    rng = jax.random.PRNGKey(0)
    r_ids, r_emb, r_layers = jax.random.split(rng, 3)
    ids = jax.random.randint(r_ids, (batch, d_seq), 0, d_vocab, dtype=jnp.int32)
    emb_table = jax.random.normal(r_emb, (d_vocab, d_embedding), jnp.float32)  # nn.Embedding ~ N(0,1)
    pe = make_positional_encoding(d_seq, d_embedding)

    torch_layers = [make_layer_params(k, d_embedding, h, expansion_factor)
                    for k in jax.random.split(r_layers, num_layers)]

    # f32 run = faithful to the PyTorch module; bf16 run = MXU-operand cast (per
    # v5e/v6e/v7x feedback), validated against a reference that mirrors the cast.
    for cdt, tol in ((jnp.float32, 2e-3), (jnp.bfloat16, 5e-3)):
        kernel_layers = [to_kernel_params(p, cdt) for p in torch_layers]
        out = encoder_forward(ids, emb_table, pe, kernel_layers, h=h, d_k=d_k)
        out = jax.block_until_ready(out)
        assert out.shape == (batch, d_seq, d_embedding)
        ref = reference_encoder(ids, emb_table, pe, torch_layers,
                                h=h, d_k=d_k, compute_dtype=cdt)
        err = float(jnp.max(jnp.abs(out - ref)))
        assert jnp.allclose(out, ref, atol=tol, rtol=tol), (str(cdt), err)

    print("KERNEL_OK")
</pallas_src>

<mosaic_0001>
module attributes {stable_mosaic.version = 11 : i64} {
  func.func @_embed_pe_kernel(%arg0: i32, %arg1: i32, %arg2: memref<2x8xi32, #tpu.memory_space<smem>>, %arg3: memref<1x1x32xf32, #tpu.memory_space<vmem>>, %arg4: memref<1x1x32xf32, #tpu.memory_space<vmem>>, %arg5: memref<1x1x32xf32, #tpu.memory_space<vmem>>) attributes {dimension_semantics = [#tpu.dimension_semantics<arbitrary>, #tpu.dimension_semantics<arbitrary>], iteration_bounds = array<i64: 2, 8>, scalar_prefetch = 1 : i64, scratch_operands = 0 : i64, tpu.core_type = #tpu.core_type<tc>, window_params = [{transform_indices = @transform_0, window_bounds = array<i64: 1, 1, 32>}, {transform_indices = @transform_1, window_bounds = array<i64: 1, 1, 32>}, {transform_indices = @transform_2, window_bounds = array<i64: 1, 1, 32>}]} {
    %c0 = arith.constant 0 : index
    %c0_0 = arith.constant 0 : index
    %c0_1 = arith.constant 0 : index
    %0 = vector.load %arg3[%c0, %c0_0, %c0_1] : memref<1x1x32xf32, #tpu.memory_space<vmem>>, vector<1x1x32xf32>
    %cst = arith.constant 5.65685415 : f32
    %1 = vector.broadcast %cst : f32 to vector<1x1x32xf32>
    %2 = arith.mulf %0, %1 : vector<1x1x32xf32>
    %c0_2 = arith.constant 0 : index
    %c0_3 = arith.constant 0 : index
    %c0_4 = arith.constant 0 : index
    %3 = vector.load %arg4[%c0_2, %c0_3, %c0_4] : memref<1x1x32xf32, #tpu.memory_space<vmem>>, vector<1x1x32xf32>
    %4 = arith.addf %2, %3 : vector<1x1x32xf32>
    %c0_5 = arith.constant 0 : index
    %c0_6 = arith.constant 0 : index
    %c0_7 = arith.constant 0 : index
    %5 = vector.load %arg5[%c0_5, %c0_6, %c0_7] : memref<1x1x32xf32, #tpu.memory_space<vmem>>, vector<1x1x32xf32>
    tpu.vector_store %arg5[%c0_5, %c0_6, %c0_7], %4 {strides = array<i32>} : memref<1x1x32xf32, #tpu.memory_space<vmem>>, vector<1x1x32xf32>,
    return
  }
  func.func @transform_0(%arg0: i32, %arg1: i32, %arg2: memref<2x8xi32, #tpu.memory_space<smem>>) -> (i32, i32, i32) {
    %0 = arith.index_cast %arg0 : i32 to index
    %1 = arith.index_cast %arg1 : i32 to index
    %2 = memref.load %arg2[%0, %1] : memref<2x8xi32, #tpu.memory_space<smem>>
    %c0_i32 = arith.constant 0 : i32
    %c0_i32_0 = arith.constant 0 : i32
    %c0_i32_1 = arith.constant 0 : i32
    return %2, %c0_i32, %c0_i32_0 : i32, i32, i32
  }
  func.func @transform_1(%arg0: i32, %arg1: i32, %arg2: memref<2x8xi32, #tpu.memory_space<smem>>) -> (i32, i32, i32) {
    %c0_i32 = arith.constant 0 : i32
    %c0_i32_0 = arith.constant 0 : i32
    %c0_i32_1 = arith.constant 0 : i32
    return %arg1, %c0_i32, %c0_i32_0 : i32, i32, i32
  }
  func.func @transform_2(%arg0: i32, %arg1: i32, %arg2: memref<2x8xi32, #tpu.memory_space<smem>>) -> (i32, i32, i32) {
    %c8_i32 = arith.constant 8 : i32
    %0 = arith.muli %arg0, %c8_i32 : i32
    %1 = arith.addi %0, %arg1 : i32
    %c0_i32 = arith.constant 0 : i32
    %c0_i32_0 = arith.constant 0 : i32
    %c0_i32_1 = arith.constant 0 : i32
    return %1, %c0_i32, %c0_i32_0 : i32, i32, i32
  }
}

</mosaic_0001>

<llo_original>
// kernel: tpu_custom_call.1
$region0: #{tpu_custom_call.1}
  #allocation0 [shape = 'u32[]', space=smem, size = 0x4, offset = 0x4, fixed_abs, tag = 'smem constant byte address 0x4 - core index']
  #allocation1 [shape = 'u32[144,128]{1,0:T(1,128)}', space=vmem, size = 0x12000, scoped, tag = 'internal scratch']
  #allocation2 [shape = 's32[1]{0}', space=sflag, size = 0x4, scoped, tag = 'scoped memory for tpu_custom_call.1']
  #allocation3 [shape = 'u8[1024]{0}', space=smem, size = 0x400, scoped, tag = 'prefetched SMEM operand 0']
  %s0 = inlined_call_operand.vmem [shape: s32[2,8], index: 0, kind: input, shape index: {}]
  %s1 = inlined_call_operand.vmem [shape: f32[64,1,32], index: 1, kind: input, shape index: {}]
  %s2 = inlined_call_operand.vmem [shape: f32[8,1,32], index: 2, kind: input, shape index: {}]
  %s3 = inlined_call_operand.hbm [shape: f32[16,1,32], index: 3, kind: output, shape index: {}]
  %s4 = sld [smem:[#allocation0]]
  $region41: #{tpu_custom_call.1} parent=0
    _
  %s6 = ssub.s32 1, %s4
  %s7 = scalar_select 0, %s6, %s4
  %s8 = sshll.u32 %s0, 4
  %s9 = int_to_ptr.vmem [resolvable:$true] %s8
  %11 = dma.vmem_to_smem %s9, 32, [#allocation3], [#allocation2]
  %12 = dma.done [#allocation2], 32
  %13 = sfence
  $region1: #{tpu_custom_call.1} parent=0
    #allocation4 [shape = 'u8[1024]{0}', space=vmem, size = 0x400, scoped, tag = 'output window, operand 0']
    #allocation5 [shape = 's32[2]{0}', space=sflag, size = 0x8, scoped, tag = 'scoped memory for tpu_custom_call.1']
    %14 = vsyncpa [#allocation5], 0
    %s15 = scalar_lea.sflag [#allocation5], 1
    %16 = vsyncpa %s15, 0
    loop: start=0, step=1, limit=18
    $region2: #{tpu_custom_call.1} parent=1 // loop_pre_header
      _
    $region3: #{tpu_custom_call.1} parent=1 // loop_header
      %s18 = sphi 0, %s22
      %p19 = scmp.ge.s32.totalorder %s18, 18
      %s25 = sphi 0, %s37
      %s26 = sphi 0, %s33
      %s27 = sphi 0, %s25
      %s28 = sphi 0, %s26
      %s29 = sphi 0, %s27
      %s30 = sphi 0, %s28
      %s56 = sphi 0, %s58
      %s59 = sphi 0, %s56
      %s60 = sphi 0, %s59
      %s76 = sphi 0, %s60
      %s82 = sphi 0, %s84
      %s85 = sphi 0, %s82
      %s86 = sphi 0, %s85
      %s102 = sphi 0, %s86
      %s112 = sphi 0, %s114
      %s115 = sphi 0, %s112
      %s116 = sphi 0, %s115
      %s132 = sphi 0, %s116
    $region4: #{tpu_custom_call.1} parent=1 // loop_header_branch
      %21 = sbr.rel (%p19) target = $region8
    $region5: #{tpu_custom_call.1} parent=1 // loop_body
      %s23 = ssub.s32 %s18, 1
      %s24 = ssub.s32 %s18, 2
      %s31 = sadd.s32 1, %s26
      %p32 = scmp.ge.s32.totalorder %s31, 8
      %s33 = scalar_select %p32, 0, %s31
      %s34 = sadd.s32 1, %s25
      %s35 = scalar_select %p32, %s34, %s25
      %p36 = scmp.ge.s32.totalorder %s35, 2
      %s37 = scalar_select %p36, 0, %s35
      %s38 = sshra.s32 %s26, 7
      %s39 = sand.u32 %s26, 127
      %s40 = sadd.s32 %s38, %s25
      %s41 = smul.u32 %s40, 128
      %s42 = sshra.s32 %s26, 7
      %s43 = sand.u32 %s26, 127
      %s44 = sadd.s32 %s41, %s43
      %s45 = sld [smem:[#allocation3 + %s44]]
      %s46 = sshra.s32 %s33, 7
      %s47 = sand.u32 %s33, 127
      %s48 = sadd.s32 %s46, %s37
      %s49 = smul.u32 %s48, 128
      %s50 = sshra.s32 %s33, 7
      %s51 = sand.u32 %s33, 127
      %s52 = sadd.s32 %s49, %s51
      %s53 = sld [smem:[#allocation3 + %s52]]
      %s54 = ssub.s32 %s45, %s53
      %p55 = scmp.eq.s32.totalorder %s54, 0
      %s57 = sadd.s32 %s56, 1
      %s58 = scalar_select %p55, %s56, %s57
      %p61 = pneg %p55
      %p62 = scmp.eq.s32.totalorder %s18, 15
      %p63 = por %p61, %p62
      %p64 = scmp.ne.s32.totalorder %s56, %s59
      %p65 = scmp.eq.s32.totalorder %s18, 0
      %p66 = por %p64, %p65
      %p67 = scmp.ne.s32.totalorder %s56, %s59
      %p68 = scmp.eq.s32.totalorder %s23, 15
      %p69 = por %p67, %p68
      %p70 = scmp.ne.s32.totalorder %s59, %s60
      %p71 = scmp.eq.s32.totalorder %s23, 0
      %p72 = por %p70, %p71
      %p73 = scmp.ne.s32.totalorder %s59, %s60
      %p74 = scmp.eq.s32.totalorder %s24, 15
      %p75 = por %p73, %p74
      %p77 = scmp.ne.s32.totalorder %s60, %s76
      %p78 = scmp.eq.s32.totalorder %s24, 0
      %p79 = por %p77, %p78
      %s80 = ssub.s32 %s26, %s33
      %p81 = scmp.eq.s32.totalorder %s80, 0
      %s83 = sadd.s32 %s82, 1
      %s84 = scalar_select %p81, %s82, %s83
      %p87 = pneg %p81
      %p88 = scmp.eq.s32.totalorder %s18, 15
      %p89 = por %p87, %p88
      %p90 = scmp.ne.s32.totalorder %s82, %s85
      %p91 = scmp.eq.s32.totalorder %s18, 0
      %p92 = por %p90, %p91
      %p93 = scmp.ne.s32.totalorder %s82, %s85
      %p94 = scmp.eq.s32.totalorder %s23, 15
      %p95 = por %p93, %p94
      %p96 = scmp.ne.s32.totalorder %s85, %s86
      %p97 = scmp.eq.s32.totalorder %s23, 0
      %p98 = por %p96, %p97
      %p99 = scmp.ne.s32.totalorder %s85, %s86
      %p100 = scmp.eq.s32.totalorder %s24, 15
      %p101 = por %p99, %p100
      %p103 = scmp.ne.s32.totalorder %s86, %s102
      %p104 = scmp.eq.s32.totalorder %s24, 0
      %p105 = por %p103, %p104
      %s106 = smul.u32 %s25, 8
      %s107 = sadd.s32 %s106, %s26
      %s108 = smul.u32 %s37, 8
      %s109 = sadd.s32 %s108, %s33
      %s110 = ssub.s32 %s107, %s109
      %p111 = scmp.eq.s32.totalorder %s110, 0
      %s113 = sadd.s32 %s112, 1
      %s114 = scalar_select %p111, %s112, %s113
      %p117 = pneg %p111
      %p118 = scmp.eq.s32.totalorder %s18, 15
      %p119 = por %p117, %p118
      %p120 = scmp.ne.s32.totalorder %s112, %s115
      %p121 = scmp.eq.s32.totalorder %s18, 0
      %p122 = por %p120, %p121
      %p123 = scmp.ne.s32.totalorder %s112, %s115
      %p124 = scmp.eq.s32.totalorder %s23, 15
      %p125 = por %p123, %p124
      %p126 = scmp.ne.s32.totalorder %s115, %s116
      %p127 = scmp.eq.s32.totalorder %s23, 0
      %p128 = por %p126, %p127
      %p129 = scmp.ne.s32.totalorder %s115, %s116
      %p130 = scmp.eq.s32.totalorder %s24, 15
      %p131 = por %p129, %p130
      %p133 = scmp.ne.s32.totalorder %s116, %s132
      %p134 = scmp.eq.s32.totalorder %s24, 0
      %p135 = por %p133, %p134
      %p136 = scmp.le.s32.totalorder 1, %s18
      %p137 = scmp.lt.s32.totalorder %s18, 17
      %p138 = pnand %p136, %p137
      %p139 = pneg %p138
      // Predicated region
      $region9: #{tpu_custom_call.1} parent=5 // pred_check
        _
      $region10: #{tpu_custom_call.1} parent=5 // pred_check_branch
        %141 = sbr.rel (%p138) target = $region12
      $region11: #{tpu_custom_call.1} parent=5 // pred_region
        %s142 = ssub.s32 %s18, 1
      $region12: #{tpu_custom_call.1} parent=5 // pred_fallthru
        _
      %p143 = scmp.lt.s32.totalorder %s18, 16
      // Predicated region
      $region13: #{tpu_custom_call.1} parent=5 // pred_check
        %p144 = pneg %p143
      $region14: #{tpu_custom_call.1} parent=5 // pred_check_branch
        %146 = sbr.rel (%p144) target = $region16
      $region15: #{tpu_custom_call.1} parent=5 // pred_region
        // Predicated region
        $region17: #{tpu_custom_call.1} parent=15 // pred_check
          %p147 = pneg %p66
        $region18: #{tpu_custom_call.1} parent=15 // pred_check_branch
          %149 = sbr.rel (%p147) target = $region20
        $region19: #{tpu_custom_call.1} parent=15 // pred_region
          %s150 = sshra.s32 %s26, 7
          %s151 = sand.u32 %s26, 127
          %s152 = sadd.s32 %s150, %s25
          %s153 = smul.u32 %s152, 128
          %s154 = sshra.s32 %s26, 7
          %s155 = sand.u32 %s26, 127
          %s156 = sadd.s32 %s153, %s155
          %s157 = sld [smem:[#allocation3 + %s156]]
          %p158 = scmp.lt.s32.totalorder %s157, 63
          %s159 = scalar_select %p158, %s157, 63
          %s160 = scalar_lea.vmem %s1, %s159
          %s161 = sshra.s32 %s26, 7
          %s162 = sand.u32 %s26, 127
          %s163 = sadd.s32 %s161, %s25
          %s164 = smul.u32 %s163, 128
          %s165 = sshra.s32 %s26, 7
          %s166 = sand.u32 %s26, 127
          %s167 = sadd.s32 %s164, %s166
          %s168 = sld [smem:[#allocation3 + %s167]]
        $region20: #{tpu_custom_call.1} parent=15 // pred_fallthru
          _
        // Predicated region
        $region21: #{tpu_custom_call.1} parent=15 // pred_check
          %p169 = pneg %p92
        $region22: #{tpu_custom_call.1} parent=15 // pred_check_branch
          %171 = sbr.rel (%p169) target = $region24
        $region23: #{tpu_custom_call.1} parent=15 // pred_region
          %p172 = scmp.lt.s32.totalorder %s26, 7
          %s173 = scalar_select %p172, %s26, 7
          %s174 = scalar_lea.vmem %s2, %s173
        $region24: #{tpu_custom_call.1} parent=15 // pred_fallthru
          _
      $region16: #{tpu_custom_call.1} parent=5 // pred_fallthru
        _
      %p175 = scmp.le.s32.totalorder 1, %s18
      %p176 = scmp.lt.s32.totalorder %s18, 17
      %p177 = pnand %p175, %p176
      %p178 = pneg %p177
      // Predicated region
      $region25: #{tpu_custom_call.1} parent=5 // pred_check
        _
      $region26: #{tpu_custom_call.1} parent=5 // pred_check_branch
        %180 = sbr.rel (%p177) target = $region28
      $region27: #{tpu_custom_call.1} parent=5 // pred_region
        %s181 = ssub.s32 %s18, 1
        %s182 = sshra.s32 %s28, 7
        %s183 = sand.u32 %s28, 127
        %s184 = sadd.s32 %s182, %s27
        %s185 = smul.u32 %s184, 128
        %s186 = sshra.s32 %s28, 7
        %s187 = sand.u32 %s28, 127
        %s188 = sadd.s32 %s185, %s187
        %s189 = sld [smem:[#allocation3 + %s188]]
        %p190 = scmp.lt.s32.totalorder %s189, 63
        %s191 = scalar_select %p190, %s189, 63
        %s192 = scalar_lea.vmem %s1, %s191
        %p193 = pneg %p72
        %p194 = pneg %p69
        %p195 = scmp.lt.s32.totalorder %s28, 7
        %s196 = scalar_select %p195, %s28, 7
        %s197 = scalar_lea.vmem %s2, %s196
        %p198 = pneg %p98
        %p199 = pneg %p95
        %p200 = pneg %p128
        %p201 = pneg %p125
        %s202 = sand.u32 %s115, 1
        %s203 = scalar_lea.sflag [#allocation5], %s202
        %s204 = sand.u32 %s115, 1
        %s205 = scalar_lea.vmem [#allocation4], %s204
        %s206 = sshra.s32 %s28, 7
        %s207 = sand.u32 %s28, 127
        %s208 = sadd.s32 %s206, %s27
        %s209 = smul.u32 %s208, 128
        %s210 = sshra.s32 %s28, 7
        %s211 = sand.u32 %s28, 127
        %s212 = sadd.s32 %s209, %s211
        %s213 = sld [smem:[#allocation3 + %s212]]
        %p214 = scmp.lt.s32.totalorder %s213, 63
        %s215 = scalar_select %p214, %s213, 63
        %s216 = scalar_lea.vmem %s1, %s215
        %s217 = sshra.s32 %s28, 7
        %s218 = sand.u32 %s28, 127
        %s219 = sadd.s32 %s217, %s27
        %s220 = smul.u32 %s219, 128
        %s221 = sshra.s32 %s28, 7
        %s222 = sand.u32 %s28, 127
        %s223 = sadd.s32 %s220, %s222
        %s224 = sld [smem:[#allocation3 + %s223]]
        %p225 = scmp.lt.s32.totalorder %s28, 7
        %s226 = scalar_select %p225, %s28, 7
        %s227 = scalar_lea.vmem %s2, %s226
        %s228 = smul.u32 %s27, 8
        %s229 = sadd.s32 %s228, %s28
        %v230 = vld [vmem:[%s216] sm:$0x1]
        %v231 = vmul.f32 %v230, 5.656854
        %v232 = vld [vmem:[%s227] sm:$0x1]
        %v233 = vadd.f32 %v231, %v232
        %vm234 = vcmask 253952
        %235 = vst.msk [vmem:[%s205] sm:$0x1] %vm234, %v233
        %s236 = sand.u32 %s115, 1
        %s237 = scalar_lea.sflag [#allocation5], %s236
        %s238 = sand.u32 %s115, 1
        %s239 = scalar_lea.vmem [#allocation4], %s238
        // Predicated region
        $region29: #{tpu_custom_call.1} parent=27 // pred_check
          %p240 = pneg %p125
        $region30: #{tpu_custom_call.1} parent=27 // pred_check_branch
          %242 = sbr.rel (%p240) target = $region32
        $region31: #{tpu_custom_call.1} parent=27 // pred_region
          %s243 = smul.u32 %s27, 8
          %s244 = sadd.s32 %s243, %s28
          %s246 = ssub.s32 16, 16
          %247 = vsyncadd %s237, %s246
          %s248 = smul.addr %s244, 16
          %s249 = scalar_lea.hbm %s3, %s248
          %s251 = sshll.u32 %s239, 4
          %s252 = int_to_ptr.vmem [resolvable:$true] %s251
          %254 = dma.vmem_to_hbm [thread:$0]  %s252, 16, %s249, %s237
        $region32: #{tpu_custom_call.1} parent=27 // pred_fallthru
          _
      $region28: #{tpu_custom_call.1} parent=5 // pred_fallthru
        _
      %p255 = scmp.le.s32.totalorder 2, %s18
      // Predicated region
      $region33: #{tpu_custom_call.1} parent=5 // pred_check
        %p256 = pneg %p255
      $region34: #{tpu_custom_call.1} parent=5 // pred_check_branch
        %258 = sbr.rel (%p256) target = $region36
      $region35: #{tpu_custom_call.1} parent=5 // pred_region
        %s259 = ssub.s32 %s18, 2
        // Predicated region
        $region37: #{tpu_custom_call.1} parent=35 // pred_check
          %p260 = pneg %p131
        $region38: #{tpu_custom_call.1} parent=35 // pred_check_branch
          %262 = sbr.rel (%p260) target = $region40
        $region39: #{tpu_custom_call.1} parent=35 // pred_region
          %s263 = sand.u32 %s116, 1
          %s264 = scalar_lea.sflag [#allocation5], %s263
          %s265 = sand.u32 %s116, 1
          %s266 = scalar_lea.vmem [#allocation4], %s265
          %267 = dma.done %s264, 16
        $region40: #{tpu_custom_call.1} parent=35 // pred_fallthru
          _
      $region36: #{tpu_custom_call.1} parent=5 // pred_fallthru
        _
    $region6: #{tpu_custom_call.1} parent=1 // loop_footer
      %s22 = sadd.s32 1, %s18
    $region7: #{tpu_custom_call.1} parent=1 // loop_footer_branch
      %17 = sbr.rel target = $region3
    $region8: #{tpu_custom_call.1} parent=1 // loop_exit
      _
    %268 = vsyncpa [#allocation5], 1
    %s269 = scalar_lea.sflag [#allocation5], 1
    %270 = vsyncpa %s269, 1

</llo_original>
